<compile_context>
chip_gen: v7x
topology: tpu7x:2x2x1
jax: 0.10.0
libtpu: 0.0.40
codegen_flags: <defaults>
</compile_context>

<pallas_src>
import jax
import jax.numpy as jnp
from jax.experimental import pallas as pl
from jax.experimental.pallas import tpu as pltpu

# ---- problem sizes (small, consistent with the module) ----
B, H, W = 2, 8, 8            # batch, grid spatial
NUM_LETTERS = 27             # letter vocabulary
PAD_ID = NUM_LETTERS         # extra letter id whose embedding row is all-zero
E = 8                        # letter embedding dim (conv in-channels)
C1 = 16                      # conv out-channels
M = 6                        # meta feature dim
HIDDEN = 32                  # shared-encoder output dim
HW = H * W                   # 64
K = 9 * E                    # im2col patch length (3*3*E) = 72


# ---------------- fused Pallas kernel ----------------

def fused_obs_kernel(p3_ref, w3_ref, b3_ref, wall_ref, meta_ref, slab_ref,
                     out_ref):
    # ---- conv3x3 + bias + ReLU as ONE block-diagonal MXU matmul ----
    #   w3: (C1*B, K*B) block-diagonal over batch; p3: (K*B, HW) rows (k, b)
    #   act[c*B + b, p] = relu(bconv[c] + sum_k wconv[k, c] * patch[b, p, k])
    conv = jnp.dot(w3_ref[...], p3_ref[...], preferred_element_type=jnp.float32)
    act = jnp.maximum(conv + b3_ref[...], 0.0)            # (C1*B, HW), value only

    # ---- grid linear (NCHW flatten + Linear) as ONE lane-dense matmul ----
    #   Wall[p, c'*HIDDEN + h] = wgrid[c'*HW + p, h]
    #   z[c*B + b, c'*HIDDEN + h] = sum_p act[c*B + b, p] * wgrid[c'*HW + p, h]
    z = jnp.dot(act, wall_ref[...],
                preferred_element_type=jnp.float32)        # (C1*B, C1*HIDDEN)

    # ---- meta linear + fc bias (wmeta / bfc packed in one slab) ----
    wmeta = slab_ref[pl.ds(0, M), :]                       # (M, HIDDEN)
    bfc = slab_ref[pl.ds(M, 1), :]                         # (1, HIDDEN)
    g = jnp.dot(meta_ref[...], wmeta,
                preferred_element_type=jnp.float32) + bfc  # (B, HIDDEN)

    # ---- diagonal-block sum: y[b,h] = sum_c z[c*B + b, c*HIDDEN + h] ----
    # 16 static slices + VPU adds (no MXU pushes, no scratch reads).
    for c in range(C1):
        g = g + z[c * B:(c + 1) * B, c * HIDDEN:(c + 1) * HIDDEN]

    out_ref[...] = jnp.maximum(g, 0.0)


def fused_pallas(p3, w3, b3, wall, meta, slab):
    flops = (2 * (C1 * B) * (K * B) * HW           # block-diagonal conv matmul
             + 2 * (C1 * B) * HW * (C1 * HIDDEN)   # grid linear (one matmul)
             + 2 * B * M * HIDDEN)                 # meta linear
    bytes_accessed = 4 * (K * B * HW + (C1 * B) * (K * B) + (C1 * B)
                          + HW * (C1 * HIDDEN) + B * M + (M + 2) * HIDDEN
                          + B * HIDDEN)
    return pl.pallas_call(
        fused_obs_kernel,
        out_shape=jax.ShapeDtypeStruct((B, HIDDEN), jnp.float32),
        grid=(1,),
        in_specs=[
            pl.BlockSpec((K * B, HW), lambda i: (0, 0)),         # p3   (per call)
            pl.BlockSpec((C1 * B, K * B), lambda i: (0, 0)),     # w3   (init const)
            pl.BlockSpec((C1 * B, 1), lambda i: (0, 0)),         # b3   (init const)
            pl.BlockSpec((HW, C1 * HIDDEN), lambda i: (0, 0)),   # Wall (init const)
            pl.BlockSpec((B, M), lambda i: (0, 0)),              # meta (per call)
            pl.BlockSpec((M + 2, HIDDEN), lambda i: (0, 0)),     # wmeta/bfc slab
        ],
        out_specs=pl.BlockSpec((B, HIDDEN), lambda i: (0, 0)),
        compiler_params=pltpu.CompilerParams(
            dimension_semantics=("arbitrary",)),
        cost_estimate=pl.CostEstimate(flops=flops, transcendentals=0,
                                      bytes_accessed=bytes_accessed),
    )(p3, w3, b3, wall, meta, slab)


# ---------------- init-time packing (runs ONCE, not per call) ----------------

def pack_params(params):
    wk = params["wconv"].reshape(K, C1)                               # (kh,kw,e)->K
    w3 = jnp.kron(wk.T, jnp.eye(B, dtype=jnp.float32))                # (C1*B, K*B)
    b3 = jnp.repeat(params["bconv"], B).reshape(C1 * B, 1)            # rows (c, b)
    # Wall[p, c*HIDDEN + h] = wgrid[c*HW + p, h]  -> lane-dense (64, 512) weight
    wall = (params["wgrid"].reshape(C1, HW, HIDDEN)
            .transpose(1, 0, 2).reshape(HW, C1 * HIDDEN))
    # wmeta + bfc (+ zero pad row) packed into one (8, HIDDEN) slab = 1 DMA
    slab = jnp.concatenate(
        [params["wmeta"], params["bfc"].reshape(1, HIDDEN),
         jnp.zeros((1, HIDDEN), jnp.float32)], axis=0)
    # embedding table with a zero row used for the conv's zero padding
    embed_aug = jnp.concatenate(
        [params["embed"], jnp.zeros((1, E), jnp.float32)], axis=0)    # (28, E)
    # im2col neighbour indices over the padded (H+2, W+2) grid, ordered (k9, p)
    nbr = []
    for kh in range(3):
        for kw in range(3):
            for h in range(H):
                for w in range(W):
                    nbr.append((h + kh) * (W + 2) + (w + kw))
    nbr_idx = jnp.asarray(nbr, dtype=jnp.int32)                       # (9*HW,)
    return dict(w3=w3, b3=b3, wall=wall, slab=slab,
                embed_aug=embed_aug, nbr_idx=nbr_idx)


# ---------------- per-call forward ----------------

def observation_shared_forward(grid_letters, meta, packed):
    # --- ObservationEncoder / LetterEncoder + im2col (wrapper glue) ---
    # TODO(synk): the data-dependent letter-id / neighbour gathers could move
    # in-kernel as a one-hot MXU matmul, but that needs a sublane row-expansion
    # relayout that is not worth the lowering risk at B=2.
    lp = jnp.pad(grid_letters, ((0, 0), (1, 1), (1, 1)),
                 constant_values=PAD_ID).reshape(B, (H + 2) * (W + 2))
    lp3 = jnp.take(lp, packed["nbr_idx"], axis=1)                     # (B, 9*HW)
    enc_p = jnp.take(packed["embed_aug"], lp3, axis=0)                # (B, 9*HW, E)
    p3 = (enc_p.reshape(B, 9, HW, E).transpose(1, 3, 0, 2)
          .reshape(K * B, HW))                                        # rows (k, b)
    # --- single fused Pallas kernel: conv + ReLU + flatten + FC heads ---
    return fused_pallas(p3, packed["w3"], packed["b3"], packed["wall"],
                        meta, packed["slab"])


# ---------------- pure-JAX reference ----------------

def reference_forward(grid_letters, meta, params):
    hi = jax.lax.Precision.HIGHEST
    enc = jnp.take(params["embed"], grid_letters, axis=0)             # (B,H,W,E)
    xp = jnp.pad(enc, ((0, 0), (1, 1), (1, 1), (0, 0)))
    patches = [xp[:, i:i + H, j:j + W, :] for i in range(3) for j in range(3)]
    cols = jnp.concatenate(patches, axis=-1).reshape(B, HW, K)
    conv = jnp.maximum(
        jnp.einsum("bpk,kc->bpc", cols, params["wconv"].reshape(K, C1),
                   precision=hi) + params["bconv"][None, None, :], 0.0)
    feat = jnp.transpose(conv, (0, 2, 1)).reshape(B, C1 * HW)         # NCHW flatten
    return jnp.maximum(
        jnp.dot(feat, params["wgrid"], precision=hi)
        + jnp.dot(meta, params["wmeta"], precision=hi)
        + params["bfc"][None, :], 0.0)


# ---------------- main ----------------

if __name__ == "__main__":
    key = jax.random.PRNGKey(0)
    ks = jax.random.split(key, 8)

    # deterministic synthetic inputs ("batched_obs" = letter grid + meta)
    grid_letters = jax.random.randint(ks[0], (B, H, W), 0, NUM_LETTERS)
    meta = jax.random.normal(ks[1], (B, M), dtype=jnp.float32)

    # deterministic synthetic parameters (wgrid rows are channel-major (c, p))
    params = {
        "embed": 0.1 * jax.random.normal(ks[2], (NUM_LETTERS, E), jnp.float32),
        "wconv": 0.1 * jax.random.normal(ks[3], (3, 3, E, C1), jnp.float32),
        "bconv": 0.01 * jax.random.normal(ks[4], (C1,), jnp.float32),
        "wgrid": 0.05 * jax.random.normal(ks[5], (C1 * HW, HIDDEN), jnp.float32),
        "wmeta": 0.1 * jax.random.normal(ks[6], (M, HIDDEN), jnp.float32),
        "bfc": 0.01 * jax.random.normal(ks[7], (HIDDEN,), jnp.float32),
    }

    packed = pack_params(params)            # parameter repacking: once, at init

    fwd = jax.jit(observation_shared_forward)
    h = jax.block_until_ready(fwd(grid_letters, meta, packed))

    h_ref = reference_forward(grid_letters, meta, params)
    assert h.shape == (B, HIDDEN)
    assert jnp.allclose(h, h_ref, atol=1e-4, rtol=1e-4)

    print("KERNEL_OK")
</pallas_src>

<mosaic_0001>
module attributes {stable_mosaic.version = 11 : i64} {
  func.func @fused_obs_kernel(%arg0: i32, %arg1: memref<144x64xf32, #tpu.memory_space<vmem>>, %arg2: memref<32x144xf32, #tpu.memory_space<vmem>>, %arg3: memref<32x1xf32, #tpu.memory_space<vmem>>, %arg4: memref<64x512xf32, #tpu.memory_space<vmem>>, %arg5: memref<2x6xf32, #tpu.memory_space<vmem>>, %arg6: memref<8x32xf32, #tpu.memory_space<vmem>>, %arg7: memref<2x32xf32, #tpu.memory_space<vmem>>) attributes {dimension_semantics = [#tpu.dimension_semantics<arbitrary>], iteration_bounds = array<i64: 1>, scalar_prefetch = 0 : i64, scratch_operands = 0 : i64, tpu.core_type = #tpu.core_type<tc>, window_params = [{pipeline_mode = #tpu.pipeline_mode<synchronous>, transform_indices = @transform_0, window_bounds = array<i64: 144, 64>}, {pipeline_mode = #tpu.pipeline_mode<synchronous>, transform_indices = @transform_1, window_bounds = array<i64: 32, 144>}, {pipeline_mode = #tpu.pipeline_mode<synchronous>, transform_indices = @transform_2, window_bounds = array<i64: 32, 1>}, {pipeline_mode = #tpu.pipeline_mode<synchronous>, transform_indices = @transform_3, window_bounds = array<i64: 64, 512>}, {pipeline_mode = #tpu.pipeline_mode<synchronous>, transform_indices = @transform_4, window_bounds = array<i64: 2, 6>}, {pipeline_mode = #tpu.pipeline_mode<synchronous>, transform_indices = @transform_5, window_bounds = array<i64: 8, 32>}, {pipeline_mode = #tpu.pipeline_mode<synchronous>, transform_indices = @transform_6, window_bounds = array<i64: 2, 32>}]} {
    %c0 = arith.constant 0 : index
    %c0_0 = arith.constant 0 : index
    %0 = vector.load %arg2[%c0, %c0_0] : memref<32x144xf32, #tpu.memory_space<vmem>>, vector<32x144xf32>
    %c0_1 = arith.constant 0 : index
    %c0_2 = arith.constant 0 : index
    %1 = vector.load %arg1[%c0_1, %c0_2] : memref<144x64xf32, #tpu.memory_space<vmem>>, vector<144x64xf32>
    %cst = arith.constant dense<0.000000e+00> : vector<32x64xf32>
    %2 = tpu.matmul %0, %1, %cst {dimension_numbers = #tpu.dot_dimension_numbers<[1], [0], [0], [1], [0, 0, 1, 1], [], []>} : vector<32x144xf32>, vector<144x64xf32>, vector<32x64xf32> -> vector<32x64xf32>
    %c0_3 = arith.constant 0 : index
    %c0_4 = arith.constant 0 : index
    %3 = vector.load %arg3[%c0_3, %c0_4] : memref<32x1xf32, #tpu.memory_space<vmem>>, vector<32x1xf32>
    %4 = vector.broadcast %3 : vector<32x1xf32> to vector<32x64xf32>
    %5 = arith.addf %2, %4 : vector<32x64xf32>
    %cst_5 = arith.constant 0.000000e+00 : f32
    %6 = vector.broadcast %cst_5 : f32 to vector<32x64xf32>
    %7 = arith.maximumf %5, %6 : vector<32x64xf32>
    %c0_6 = arith.constant 0 : index
    %c0_7 = arith.constant 0 : index
    %8 = vector.load %arg4[%c0_6, %c0_7] : memref<64x512xf32, #tpu.memory_space<vmem>>, vector<64x512xf32>
    %cst_8 = arith.constant dense<0.000000e+00> : vector<32x512xf32>
    %9 = tpu.matmul %7, %8, %cst_8 {dimension_numbers = #tpu.dot_dimension_numbers<[1], [0], [0], [1], [0, 0, 1, 1], [], []>} : vector<32x64xf32>, vector<64x512xf32>, vector<32x512xf32> -> vector<32x512xf32>
    %c0_9 = arith.constant 0 : index
    %c0_10 = arith.constant 0 : index
    %10 = vector.load %arg6[%c0_9, %c0_10] : memref<8x32xf32, #tpu.memory_space<vmem>>, vector<6x32xf32>
    %c6 = arith.constant 6 : index
    %c0_11 = arith.constant 0 : index
    %11 = vector.load %arg6[%c6, %c0_11] : memref<8x32xf32, #tpu.memory_space<vmem>>, vector<1x32xf32>
    %c0_12 = arith.constant 0 : index
    %c0_13 = arith.constant 0 : index
    %12 = vector.load %arg5[%c0_12, %c0_13] : memref<2x6xf32, #tpu.memory_space<vmem>>, vector<2x6xf32>
    %cst_14 = arith.constant dense<0.000000e+00> : vector<2x32xf32>
    %13 = tpu.matmul %12, %10, %cst_14 {dimension_numbers = #tpu.dot_dimension_numbers<[1], [0], [0], [1], [0, 0, 1, 1], [], []>} : vector<2x6xf32>, vector<6x32xf32>, vector<2x32xf32> -> vector<2x32xf32>
    %14 = vector.broadcast %11 : vector<1x32xf32> to vector<2x32xf32>
    %15 = arith.addf %13, %14 : vector<2x32xf32>
    %16 = vector.extract_strided_slice %9 {offsets = [0, 0], sizes = [2, 32], strides = [1, 1]} : vector<32x512xf32> to vector<2x32xf32>
    %17 = arith.addf %15, %16 : vector<2x32xf32>
    %18 = vector.extract_strided_slice %9 {offsets = [2, 32], sizes = [2, 32], strides = [1, 1]} : vector<32x512xf32> to vector<2x32xf32>
    %19 = arith.addf %17, %18 : vector<2x32xf32>
    %20 = vector.extract_strided_slice %9 {offsets = [4, 64], sizes = [2, 32], strides = [1, 1]} : vector<32x512xf32> to vector<2x32xf32>
    %21 = arith.addf %19, %20 : vector<2x32xf32>
    %22 = vector.extract_strided_slice %9 {offsets = [6, 96], sizes = [2, 32], strides = [1, 1]} : vector<32x512xf32> to vector<2x32xf32>
    %23 = arith.addf %21, %22 : vector<2x32xf32>
    %24 = vector.extract_strided_slice %9 {offsets = [8, 128], sizes = [2, 32], strides = [1, 1]} : vector<32x512xf32> to vector<2x32xf32>
    %25 = arith.addf %23, %24 : vector<2x32xf32>
    %26 = vector.extract_strided_slice %9 {offsets = [10, 160], sizes = [2, 32], strides = [1, 1]} : vector<32x512xf32> to vector<2x32xf32>
    %27 = arith.addf %25, %26 : vector<2x32xf32>
    %28 = vector.extract_strided_slice %9 {offsets = [12, 192], sizes = [2, 32], strides = [1, 1]} : vector<32x512xf32> to vector<2x32xf32>
    %29 = arith.addf %27, %28 : vector<2x32xf32>
    %30 = vector.extract_strided_slice %9 {offsets = [14, 224], sizes = [2, 32], strides = [1, 1]} : vector<32x512xf32> to vector<2x32xf32>
    %31 = arith.addf %29, %30 : vector<2x32xf32>
    %32 = vector.extract_strided_slice %9 {offsets = [16, 256], sizes = [2, 32], strides = [1, 1]} : vector<32x512xf32> to vector<2x32xf32>
    %33 = arith.addf %31, %32 : vector<2x32xf32>
    %34 = vector.extract_strided_slice %9 {offsets = [18, 288], sizes = [2, 32], strides = [1, 1]} : vector<32x512xf32> to vector<2x32xf32>
    %35 = arith.addf %33, %34 : vector<2x32xf32>
    %36 = vector.extract_strided_slice %9 {offsets = [20, 320], sizes = [2, 32], strides = [1, 1]} : vector<32x512xf32> to vector<2x32xf32>
    %37 = arith.addf %35, %36 : vector<2x32xf32>
    %38 = vector.extract_strided_slice %9 {offsets = [22, 352], sizes = [2, 32], strides = [1, 1]} : vector<32x512xf32> to vector<2x32xf32>
    %39 = arith.addf %37, %38 : vector<2x32xf32>
    %40 = vector.extract_strided_slice %9 {offsets = [24, 384], sizes = [2, 32], strides = [1, 1]} : vector<32x512xf32> to vector<2x32xf32>
    %41 = arith.addf %39, %40 : vector<2x32xf32>
    %42 = vector.extract_strided_slice %9 {offsets = [26, 416], sizes = [2, 32], strides = [1, 1]} : vector<32x512xf32> to vector<2x32xf32>
    %43 = arith.addf %41, %42 : vector<2x32xf32>
    %44 = vector.extract_strided_slice %9 {offsets = [28, 448], sizes = [2, 32], strides = [1, 1]} : vector<32x512xf32> to vector<2x32xf32>
    %45 = arith.addf %43, %44 : vector<2x32xf32>
    %46 = vector.extract_strided_slice %9 {offsets = [30, 480], sizes = [2, 32], strides = [1, 1]} : vector<32x512xf32> to vector<2x32xf32>
    %47 = arith.addf %45, %46 : vector<2x32xf32>
    %cst_15 = arith.constant 0.000000e+00 : f32
    %48 = vector.broadcast %cst_15 : f32 to vector<2x32xf32>
    %49 = arith.maximumf %47, %48 : vector<2x32xf32>
    %c0_16 = arith.constant 0 : index
    %c0_17 = arith.constant 0 : index
    %50 = vector.load %arg7[%c0_16, %c0_17] : memref<2x32xf32, #tpu.memory_space<vmem>>, vector<2x32xf32>
    tpu.vector_store %arg7[%c0_16, %c0_17], %49 {strides = array<i32>} : memref<2x32xf32, #tpu.memory_space<vmem>>, vector<2x32xf32>,
    return
  }
  func.func @transform_0(%arg0: i32) -> (i32, i32) {
    %c0_i32 = arith.constant 0 : i32
    %c0_i32_0 = arith.constant 0 : i32
    %c0_i32_1 = arith.constant 0 : i32
    return %c0_i32, %c0_i32_0 : i32, i32
  }
  func.func @transform_1(%arg0: i32) -> (i32, i32) {
    %c0_i32 = arith.constant 0 : i32
    %c0_i32_0 = arith.constant 0 : i32
    %c0_i32_1 = arith.constant 0 : i32
    return %c0_i32, %c0_i32_0 : i32, i32
  }
  func.func @transform_2(%arg0: i32) -> (i32, i32) {
    %c0_i32 = arith.constant 0 : i32
    %c0_i32_0 = arith.constant 0 : i32
    %c0_i32_1 = arith.constant 0 : i32
    return %c0_i32, %c0_i32_0 : i32, i32
  }
  func.func @transform_3(%arg0: i32) -> (i32, i32) {
    %c0_i32 = arith.constant 0 : i32
    %c0_i32_0 = arith.constant 0 : i32
    %c0_i32_1 = arith.constant 0 : i32
    return %c0_i32, %c0_i32_0 : i32, i32
  }
  func.func @transform_4(%arg0: i32) -> (i32, i32) {
    %c0_i32 = arith.constant 0 : i32
    %c0_i32_0 = arith.constant 0 : i32
    %c0_i32_1 = arith.constant 0 : i32
    return %c0_i32, %c0_i32_0 : i32, i32
  }
  func.func @transform_5(%arg0: i32) -> (i32, i32) {
    %c0_i32 = arith.constant 0 : i32
    %c0_i32_0 = arith.constant 0 : i32
    %c0_i32_1 = arith.constant 0 : i32
    return %c0_i32, %c0_i32_0 : i32, i32
  }
  func.func @transform_6(%arg0: i32) -> (i32, i32) {
    %c0_i32 = arith.constant 0 : i32
    %c0_i32_0 = arith.constant 0 : i32
    %c0_i32_1 = arith.constant 0 : i32
    return %c0_i32, %c0_i32_0 : i32, i32
  }
}

</mosaic_0001>

<llo_original>
// kernel: observation_shared_forward.1
$region0: #{observation_shared_forward.1}
  #allocation0 [shape = 'u32[]', space=smem, size = 0x4, offset = 0x4, fixed_abs, tag = 'smem constant byte address 0x4 - core index']
  #allocation1 [shape = 'u32[144,128]{1,0:T(1,128)}', space=vmem, size = 0x12000, scoped, tag = 'internal scratch']
  %s0 = inlined_call_operand.vmem [shape: f32[144,64], index: 0, kind: input, shape index: {}]
  %s1 = inlined_call_operand.vmem [shape: f32[32,144], index: 1, kind: input, shape index: {}]
  %s2 = inlined_call_operand.vmem [shape: f32[32,1], index: 2, kind: input, shape index: {}]
  %s3 = inlined_call_operand.vmem [shape: f32[64,512], index: 3, kind: input, shape index: {}]
  %s4 = inlined_call_operand.vmem [shape: f32[2,6], index: 4, kind: input, shape index: {}]
  %s5 = inlined_call_operand.vmem [shape: f32[8,32], index: 5, kind: input, shape index: {}]
  %s6 = inlined_call_operand.hbm [shape: f32[2,32], index: 6, kind: output, shape index: {}]
  %s7 = sld [smem:[#allocation0]]
  $region34: #{observation_shared_forward.1} parent=0
    _
  %s9 = ssub.s32 1, %s7
  %s10 = scalar_select 0, %s9, %s7
  $region1: #{observation_shared_forward.1} parent=0
    #allocation2 [shape = 'u8[1024]{0}', space=vmem, size = 0x400, scoped, tag = 'output window, operand 0, single buffered']
    #allocation3 [shape = 's32[1]{0}', space=sflag, size = 0x4, scoped, tag = 'scoped memory for observation_shared_forward.1']
    %11 = vsyncpa [#allocation3], 0
    // Predicated region
    $region2: #{observation_shared_forward.1} parent=1 // pred_check
      _
    $region3: #{observation_shared_forward.1} parent=1 // pred_check_branch
      %13 = sbr.rel (0) target = $region5
    $region4: #{observation_shared_forward.1} parent=1 // pred_region
      _
    $region5: #{observation_shared_forward.1} parent=1 // pred_fallthru
      _
    // Predicated region
    $region6: #{observation_shared_forward.1} parent=1 // pred_check
      _
    $region7: #{observation_shared_forward.1} parent=1 // pred_check_branch
      %15 = sbr.rel (0) target = $region9
    $region8: #{observation_shared_forward.1} parent=1 // pred_region
      _
    $region9: #{observation_shared_forward.1} parent=1 // pred_fallthru
      _
    // Predicated region
    $region10: #{observation_shared_forward.1} parent=1 // pred_check
      _
    $region11: #{observation_shared_forward.1} parent=1 // pred_check_branch
      %17 = sbr.rel (0) target = $region13
    $region12: #{observation_shared_forward.1} parent=1 // pred_region
      _
    $region13: #{observation_shared_forward.1} parent=1 // pred_fallthru
      _
    // Predicated region
    $region14: #{observation_shared_forward.1} parent=1 // pred_check
      _
    $region15: #{observation_shared_forward.1} parent=1 // pred_check_branch
      %19 = sbr.rel (0) target = $region17
    $region16: #{observation_shared_forward.1} parent=1 // pred_region
      _
    $region17: #{observation_shared_forward.1} parent=1 // pred_fallthru
      _
    // Predicated region
    $region18: #{observation_shared_forward.1} parent=1 // pred_check
      _
    $region19: #{observation_shared_forward.1} parent=1 // pred_check_branch
      %21 = sbr.rel (0) target = $region21
    $region20: #{observation_shared_forward.1} parent=1 // pred_region
      _
    $region21: #{observation_shared_forward.1} parent=1 // pred_fallthru
      _
    // Predicated region
    $region22: #{observation_shared_forward.1} parent=1 // pred_check
      _
    $region23: #{observation_shared_forward.1} parent=1 // pred_check_branch
      %23 = sbr.rel (0) target = $region25
    $region24: #{observation_shared_forward.1} parent=1 // pred_region
      _
    $region25: #{observation_shared_forward.1} parent=1 // pred_fallthru
      _
    %v24 = vld [vmem:[%s1] sm:$0xff]
    %v25 = vld [vmem:[%s1 + $0x8] sm:$0xff]
    %v26 = vld [vmem:[%s1 + $0x10] sm:$0xff]
    %v27 = vld [vmem:[%s1 + $0x18] sm:$0xff]
    %v28 = vld [vmem:[%s1 + $0x20] sm:$0xff]
    %v29 = vld [vmem:[%s1 + $0x28] sm:$0xff]
    %v30 = vld [vmem:[%s1 + $0x30] sm:$0xff]
    %v31 = vld [vmem:[%s1 + $0x38] sm:$0xff]
    %v32 = vld [vmem:[%s0] sm:$0xff]
    %v33 = vld [vmem:[%s0 + $0x8] sm:$0xff]
    %v34 = vld [vmem:[%s0 + $0x10] sm:$0xff]
    %v35 = vld [vmem:[%s0 + $0x18] sm:$0xff]
    %v36 = vld [vmem:[%s0 + $0x20] sm:$0xff]
    %v37 = vld [vmem:[%s0 + $0x28] sm:$0xff]
    %v38 = vld [vmem:[%s0 + $0x30] sm:$0xff]
    %v39 = vld [vmem:[%s0 + $0x38] sm:$0xff]
    %v40 = vld [vmem:[%s0 + $0x40] sm:$0xff]
    %v41 = vld [vmem:[%s0 + $0x48] sm:$0xff]
    %v42 = vld [vmem:[%s0 + $0x50] sm:$0xff]
    %v43 = vld [vmem:[%s0 + $0x58] sm:$0xff]
    %v44 = vld [vmem:[%s0 + $0x60] sm:$0xff]
    %v45 = vld [vmem:[%s0 + $0x68] sm:$0xff]
    %v46 = vld [vmem:[%s0 + $0x70] sm:$0xff]
    %v47 = vld [vmem:[%s0 + $0x78] sm:$0xff]
    %v48 = vld [vmem:[%s0 + $0x80] sm:$0xff]
    %v49 = vld [vmem:[%s0 + $0x88] sm:$0xff]
    %v50 = vld [vmem:[%s2] sm:$0xff]
    %v51 = vld [vmem:[%s2 + $0x8] sm:$0xff]
    %v52 = vld [vmem:[%s2 + $0x10] sm:$0xff]
    %v53 = vld [vmem:[%s2 + $0x18] sm:$0xff]
    %55 = vset.pattern.permute.xlu0 0
    %56 = vperm.xlu0 %55, %v50
    %v57 = vpop.permute.xlu0 %56
    %60 = vset.pattern.permute.xlu0 0
    %61 = vperm.xlu0 %60, %v51
    %v62 = vpop.permute.xlu0 %61
    %65 = vset.pattern.permute.xlu0 0
    %66 = vperm.xlu0 %65, %v52
    %v67 = vpop.permute.xlu0 %66
    %70 = vset.pattern.permute.xlu0 0
    %71 = vperm.xlu0 %70, %v53
    %v72 = vpop.permute.xlu0 %71
    %vm74 = vcmask 130048
    %v76 = vsel %vm74, %v25, 0
    %v79 = vsel %vm74, %v27, 0
    %v82 = vsel %vm74, %v29, 0
    %v85 = vsel %vm74, %v31, 0
    %87 = vmatprep.subr.mxu0 0.0
    %88 = vmatpush1.msra.mxu0 %v32
    %89 = vmatprep.subr.mxu0 0.0
    %90 = vmatpush1.msra.mxu0 %v33
    %91 = vmatprep.subr.mxu0 0.0
    %92 = vmatpush1.msra.mxu0 %v34
    %93 = vmatprep.subr.mxu0 0.0
    %94 = vmatpush1.msra.mxu0 %v35
    %95 = vmatprep.subr.mxu0 0.0
    %96 = vmatpush1.msra.mxu0 %v36
    %97 = vmatprep.subr.mxu0 0.0
    %98 = vmatpush1.msra.mxu0 %v37
    %99 = vmatprep.subr.mxu0 0.0
    %100 = vmatpush1.msra.mxu0 %v38
    %101 = vmatprep.subr.mxu0 0.0
    %102 = vmatpush1.msra.mxu0 %v39
    %103 = vmatprep.subr.mxu0 0.0
    %104 = vmatpush1.msra.mxu0 %v40
    %105 = vmatprep.subr.mxu0 0.0
    %106 = vmatpush1.msra.mxu0 %v41
    %107 = vmatprep.subr.mxu0 0.0
    %108 = vmatpush1.msra.mxu0 %v42
    %109 = vmatprep.subr.mxu0 0.0
    %110 = vmatpush1.msra.mxu0 %v43
    %111 = vmatprep.subr.mxu0 0.0
    %112 = vmatpush1.msra.mxu0 %v44
    %113 = vmatprep.subr.mxu0 0.0
    %114 = vmatpush1.msra.mxu0 %v45
    %115 = vmatprep.subr.mxu0 0.0
    %116 = vmatpush1.msra.mxu0 %v46
    %117 = vmatprep.subr.mxu0 0.0
    %118 = vmatpush1.msra.mxu0 %v47
    %119 = vmatprep.subr.mxu0 0.0
    %120 = vmatpush1.msra.mxu0 %v48
    %121 = vmatprep.subr.mxu0 0.0
    %122 = vmatpush1.msra.mxu0 %v49
    %123 = vmatprep.subr.mxu0 0.0
    %124 = vmatpush1.msra.mxu0 0.0
    %125 = vmatprep.subr.mxu0 0.0
    %126 = vmatpush1.msra.mxu0 0.0
    %127 = vmatprep.subr.mxu0 0.0
    %128 = vmatpush1.msra.mxu0 0.0
    %129 = vmatprep.subr.mxu0 0.0
    %130 = vmatpush1.msra.mxu0 0.0
    %131 = vmatprep.subr.mxu0 0.0
    %132 = vmatpush1.msra.mxu0 0.0
    %133 = vmatprep.subr.mxu0 0.0
    %134 = vmatpush1.msra.mxu0 0.0
    %135 = vmatprep.subr.mxu0 0.0
    %136 = vmatpush1.msra.mxu0 0.0
    %137 = vmatprep.subr.mxu0 0.0
    %138 = vmatpush1.msra.mxu0 0.0
    %139 = vmatprep.subr.mxu0 0.0
    %140 = vmatpush1.msra.mxu0 0.0
    %141 = vmatprep.subr.mxu0 0.0
    %142 = vmatpush1.msra.mxu0 0.0
    %143 = vmatprep.subr.mxu0 0.0
    %144 = vmatpush1.msra.mxu0 0.0
    %145 = vmatprep.subr.mxu0 0.0
    %146 = vmatpush1.msra.mxu0 0.0
    %147 = vmatprep.subr.mxu0 0.0
    %148 = vmatpush1.msra.mxu0 0.0
    %149 = vmatprep.subr.mxu0 0.0
    %150 = vmatpush1.msra.mxu0 0.0
    %151 = vmatprep.mubr.f32.mxu0 %v76
    %152 = vmatmul.mubr.f32.gmra.mrb[0].mxu0 %v24
    %v153 = vpop.f32.mrb[0].mxu0
    %v154 = vadd.f32 %v57, %v153
    %v155 = vpop.f32.mrb[0].mxu0
    %156 = vmatprep.mubr.f32.mxu0 %v79
    %157 = vmatmul.mubr.f32.gmra.mrb[0].mxu0 %v26
    %v158 = vpop.f32.mrb[0].mxu0
    %v159 = vadd.f32 %v62, %v158
    %v160 = vpop.f32.mrb[0].mxu0
    %161 = vmatprep.mubr.f32.mxu0 %v82
    %162 = vmatmul.mubr.f32.gmra.mrb[0].mxu0 %v28
    %v163 = vpop.f32.mrb[0].mxu0
    %v164 = vadd.f32 %v67, %v163
    %v165 = vpop.f32.mrb[0].mxu0
    %166 = vmatprep.mubr.f32.mxu0 %v85
    %167 = vmatmul.mubr.f32.gmra.mrb[0].mxu0 %v30
    %v168 = vpop.f32.mrb[0].mxu0
    %v169 = vadd.f32 %v72, %v168
    %v170 = vpop.f32.mrb[0].mxu0
    %171 = vdwg.mxu0
    %v172 = vmax.f32 %v154, 0.0
    %v173 = vmax.f32 %v159, 0.0
    %v174 = vmax.f32 %v164, 0.0
    %v175 = vmax.f32 %v169, 0.0
    %v176 = vld [vmem:[%s3] sm:$0xff]
    %v177 = vld [vmem:[%s3 + $0x8] sm:$0xff]
    %v178 = vld [vmem:[%s3 + $0x10] sm:$0xff]
    %v179 = vld [vmem:[%s3 + $0x18] sm:$0xff]
    %v180 = vld [vmem:[%s3 + $0x20] sm:$0xff]
    %v181 = vld [vmem:[%s3 + $0x28] sm:$0xff]
    %v182 = vld [vmem:[%s3 + $0x30] sm:$0xff]
    %v183 = vld [vmem:[%s3 + $0x38] sm:$0xff]
    %v184 = vld [vmem:[%s3 + $0x40] sm:$0xff]
    %v185 = vld [vmem:[%s3 + $0x48] sm:$0xff]
    %v186 = vld [vmem:[%s3 + $0x50] sm:$0xff]
    %v187 = vld [vmem:[%s3 + $0x58] sm:$0xff]
    %v188 = vld [vmem:[%s3 + $0x60] sm:$0xff]
    %v189 = vld [vmem:[%s3 + $0x68] sm:$0xff]
    %v190 = vld [vmem:[%s3 + $0x70] sm:$0xff]
    %v191 = vld [vmem:[%s3 + $0x78] sm:$0xff]
    %v192 = vld [vmem:[%s3 + $0x80] sm:$0xff]
    %v193 = vld [vmem:[%s3 + $0x88] sm:$0xff]
    %v194 = vld [vmem:[%s3 + $0x90] sm:$0xff]
    %v195 = vld [vmem:[%s3 + $0x98] sm:$0xff]
    %v196 = vld [vmem:[%s3 + $0xa0] sm:$0xff]
    %v197 = vld [vmem:[%s3 + $0xa8] sm:$0xff]
    %v198 = vld [vmem:[%s3 + $0xb0] sm:$0xff]
    %v199 = vld [vmem:[%s3 + $0xb8] sm:$0xff]
    %v200 = vld [vmem:[%s3 + $0xc0] sm:$0xff]
    %v201 = vld [vmem:[%s3 + $0xc8] sm:$0xff]
    %v202 = vld [vmem:[%s3 + $0xd0] sm:$0xff]
    %v203 = vld [vmem:[%s3 + $0xd8] sm:$0xff]
    %v204 = vld [vmem:[%s3 + $0xe0] sm:$0xff]
    %v205 = vld [vmem:[%s3 + $0xe8] sm:$0xff]
    %v206 = vld [vmem:[%s3 + $0xf0] sm:$0xff]
    %v207 = vld [vmem:[%s3 + $0xf8] sm:$0xff]
    %vm208 = vcmask 523264
    %v210 = vsel %vm208, %v172, 0
    %v213 = vsel %vm208, %v173, 0
    %v216 = vsel %vm208, %v174, 0
    %v219 = vsel %vm208, %v175, 0
    %221 = vmatprep.subr.mxu0 %v177
    %222 = vmatpush1.msra.mxu0 %v176
    %223 = vmatprep.subr.mxu0 %v181
    %224 = vmatpush1.msra.mxu0 %v180
    %225 = vmatprep.subr.mxu0 %v185
    %226 = vmatpush1.msra.mxu0 %v184
    %227 = vmatprep.subr.mxu0 %v189
    %228 = vmatpush1.msra.mxu0 %v188
    %229 = vmatprep.subr.mxu0 %v193
    %230 = vmatpush1.msra.mxu0 %v192
    %231 = vmatprep.subr.mxu0 %v197
    %232 = vmatpush1.msra.mxu0 %v196
    %233 = vmatprep.subr.mxu0 %v201
    %234 = vmatpush1.msra.mxu0 %v200
    %235 = vmatprep.subr.mxu0 %v205
    %236 = vmatpush1.msra.mxu0 %v204
    %237 = vmatprep.subr.mxu0 0.0
    %238 = vmatpush1.msra.mxu0 0.0
    %239 = vmatprep.subr.mxu0 0.0
    %240 = vmatpush1.msra.mxu0 0.0
    %241 = vmatprep.subr.mxu0 0.0
    %242 = vmatpush1.msra.mxu0 0.0
    %243 = vmatprep.subr.mxu0 0.0
    %244 = vmatpush1.msra.mxu0 0.0
    %245 = vmatprep.subr.mxu0 0.0
    %246 = vmatpush1.msra.mxu0 0.0
    %247 = vmatprep.subr.mxu0 0.0
    %248 = vmatpush1.msra.mxu0 0.0
    %249 = vmatprep.subr.mxu0 0.0
    %250 = vmatpush1.msra.mxu0 0.0
    %251 = vmatprep.subr.mxu0 0.0
    %252 = vmatpush1.msra.mxu0 0.0
    %253 = vmatprep.subr.mxu0 0.0
    %254 = vmatpush1.msra.mxu0 0.0
    %255 = vmatprep.subr.mxu0 0.0
    %256 = vmatpush1.msra.mxu0 0.0
    %257 = vmatprep.subr.mxu0 0.0
    %258 = vmatpush1.msra.mxu0 0.0
    %259 = vmatprep.subr.mxu0 0.0
    %260 = vmatpush1.msra.mxu0 0.0
    %261 = vmatprep.subr.mxu0 0.0
    %262 = vmatpush1.msra.mxu0 0.0
    %263 = vmatprep.subr.mxu0 0.0
    %264 = vmatpush1.msra.mxu0 0.0
    %265 = vmatprep.subr.mxu0 0.0
    %266 = vmatpush1.msra.mxu0 0.0
    %267 = vmatprep.subr.mxu0 0.0
    %268 = vmatpush1.msra.mxu0 0.0
    %269 = vmatprep.subr.mxu0 0.0
    %270 = vmatpush1.msra.mxu0 0.0
    %271 = vmatprep.subr.mxu0 0.0
    %272 = vmatpush1.msra.mxu0 0.0
    %273 = vmatprep.subr.mxu0 0.0
    %274 = vmatpush1.msra.mxu0 0.0
    %275 = vmatprep.subr.mxu0 0.0
    %276 = vmatpush1.msra.mxu0 0.0
    %277 = vmatprep.subr.mxu0 0.0
    %278 = vmatpush1.msra.mxu0 0.0
    %279 = vmatprep.subr.mxu0 0.0
    %280 = vmatpush1.msra.mxu0 0.0
    %281 = vmatprep.subr.mxu0 0.0
    %282 = vmatpush1.msra.mxu0 0.0
    %283 = vmatprep.subr.mxu0 0.0
    %284 = vmatpush1.msra.mxu0 0.0
    %285 = vmatprep.mubr.f32.mxu0 0.0
    %286 = vmatmul.mubr.f32.gmra.mrb[0].mxu0 %v210
    %v287 = vpop.f32.mrb[0].mxu0
    %v288 = vadd.f32 0.0, %v287
    %v289 = vpop.f32.mrb[0].mxu0
    %290 = vmatprep.mubr.f32.mxu0 0.0
    %291 = vmatmul.mubr.f32.gmra.mrb[0].mxu0 %v213
    %v292 = vpop.f32.mrb[0].mxu0
    %v293 = vpop.f32.mrb[0].mxu0
    %v294 = vadd.f32 0.0, %v293
    %295 = vmatprep.mubr.f32.mxu0 0.0
    %296 = vmatmul.mubr.f32.gmra.mrb[0].mxu0 %v216
    %v297 = vpop.f32.mrb[0].mxu0
    %v298 = vpop.f32.mrb[0].mxu0
    %299 = vmatprep.mubr.f32.mxu0 0.0
    %300 = vmatmul.mubr.f32.gmra.mrb[0].mxu0 %v219
    %v301 = vpop.f32.mrb[0].mxu0
    %v302 = vpop.f32.mrb[0].mxu0
    %303 = vdwg.mxu0
    %304 = vmatprep.subr.mxu0 %v179
    %305 = vmatpush1.msra.mxu0 %v178
    %306 = vmatprep.subr.mxu0 %v183
    %307 = vmatpush1.msra.mxu0 %v182
    %308 = vmatprep.subr.mxu0 %v187
    %309 = vmatpush1.msra.mxu0 %v186
    %310 = vmatprep.subr.mxu0 %v191
    %311 = vmatpush1.msra.mxu0 %v190
    %312 = vmatprep.subr.mxu0 %v195
    %313 = vmatpush1.msra.mxu0 %v194
    %314 = vmatprep.subr.mxu0 %v199
    %315 = vmatpush1.msra.mxu0 %v198
    %316 = vmatprep.subr.mxu0 %v203
    %317 = vmatpush1.msra.mxu0 %v202
    %318 = vmatprep.subr.mxu0 %v207
    %319 = vmatpush1.msra.mxu0 %v206
    %320 = vmatprep.subr.mxu0 0.0
    %321 = vmatpush1.msra.mxu0 0.0
    %322 = vmatprep.subr.mxu0 0.0
    %323 = vmatpush1.msra.mxu0 0.0
    %324 = vmatprep.subr.mxu0 0.0
    %325 = vmatpush1.msra.mxu0 0.0
    %326 = vmatprep.subr.mxu0 0.0
    %327 = vmatpush1.msra.mxu0 0.0
    %328 = vmatprep.subr.mxu0 0.0
    %329 = vmatpush1.msra.mxu0 0.0
    %330 = vmatprep.subr.mxu0 0.0
    %331 = vmatpush1.msra.mxu0 0.0
    %332 = vmatprep.subr.mxu0 0.0
    %333 = vmatpush1.msra.mxu0 0.0
    %334 = vmatprep.subr.mxu0 0.0
    %335 = vmatpush1.msra.mxu0 0.0
    %336 = vmatprep.subr.mxu0 0.0
    %337 = vmatpush1.msra.mxu0 0.0
    %338 = vmatprep.subr.mxu0 0.0
    %339 = vmatpush1.msra.mxu0 0.0
    %340 = vmatprep.subr.mxu0 0.0
    %341 = vmatpush1.msra.mxu0 0.0
    %342 = vmatprep.subr.mxu0 0.0
    %343 = vmatpush1.msra.mxu0 0.0
    %344 = vmatprep.subr.mxu0 0.0
    %345 = vmatpush1.msra.mxu0 0.0
    %346 = vmatprep.subr.mxu0 0.0
    %347 = vmatpush1.msra.mxu0 0.0
    %348 = vmatprep.subr.mxu0 0.0
    %349 = vmatpush1.msra.mxu0 0.0
    %350 = vmatprep.subr.mxu0 0.0
    %351 = vmatpush1.msra.mxu0 0.0
    %352 = vmatprep.subr.mxu0 0.0
    %353 = vmatpush1.msra.mxu0 0.0
    %354 = vmatprep.subr.mxu0 0.0
    %355 = vmatpush1.msra.mxu0 0.0
    %356 = vmatprep.subr.mxu0 0.0
    %357 = vmatpush1.msra.mxu0 0.0
    %358 = vmatprep.subr.mxu0 0.0
    %359 = vmatpush1.msra.mxu0 0.0
    %360 = vmatprep.subr.mxu0 0.0
    %361 = vmatpush1.msra.mxu0 0.0
    %362 = vmatprep.subr.mxu0 0.0
    %363 = vmatpush1.msra.mxu0 0.0
    %364 = vmatprep.subr.mxu0 0.0
    %365 = vmatpush1.msra.mxu0 0.0
    %366 = vmatprep.subr.mxu0 0.0
    %367 = vmatpush1.msra.mxu0 0.0
    %368 = vmatprep.mubr.f32.mxu0 0.0
    %369 = vmatmul.mubr.f32.gmra.mrb[0].mxu0 %v210
    %v370 = vpop.f32.mrb[0].mxu0
    %v371 = vpop.f32.mrb[0].mxu0
    %372 = vmatprep.mubr.f32.mxu0 0.0
    %373 = vmatmul.mubr.f32.gmra.mrb[0].mxu0 %v213
    %v374 = vpop.f32.mrb[0].mxu0
    %v375 = vpop.f32.mrb[0].mxu0
    %376 = vmatprep.mubr.f32.mxu0 0.0
    %377 = vmatmul.mubr.f32.gmra.mrb[0].mxu0 %v216
    %v378 = vpop.f32.mrb[0].mxu0
    %v379 = vadd.f32 0.0, %v378
    %v380 = vpop.f32.mrb[0].mxu0
    %381 = vmatprep.mubr.f32.mxu0 0.0
    %382 = vmatmul.mubr.f32.gmra.mrb[0].mxu0 %v219
    %v383 = vpop.f32.mrb[0].mxu0
    %v384 = vpop.f32.mrb[0].mxu0
    %v385 = vadd.f32 0.0, %v384
    %386 = vdwg.mxu0
    %v387 = vld [vmem:[%s5] sm:$0x3f]
    %v388 = vld [vmem:[%s5 + $0x6] sm:$0x1]
    %v389 = vld [vmem:[%s4] sm:$0x3]
    %v390 = vlaneseq
    %v391 = vshrl.u32 %v390, 7
    %v392 = vsub.s32 0, %v391
    %v393 = vrot.slane %v388, %v392
    %vm394 = vcmask 48128
    %v396 = vsel %vm394, %v389, 0
    %vm398 = vcmask 1045504
    %v400 = vsel %vm398, %v387, 0
    %402 = vmatprep.subr.mxu0 0.0
    %403 = vmatpush1.msra.mxu0 %v400
    %404 = vmatprep.subr.mxu0 0.0
    %405 = vmatpush1.msra.mxu0 0.0
    %406 = vmatprep.subr.mxu0 0.0
    %407 = vmatpush1.msra.mxu0 0.0
    %408 = vmatprep.subr.mxu0 0.0
    %409 = vmatpush1.msra.mxu0 0.0
    %410 = vmatprep.subr.mxu0 0.0
    %411 = vmatpush1.msra.mxu0 0.0
    %412 = vmatprep.subr.mxu0 0.0
    %413 = vmatpush1.msra.mxu0 0.0
    %414 = vmatprep.subr.mxu0 0.0
    %415 = vmatpush1.msra.mxu0 0.0
    %416 = vmatprep.subr.mxu0 0.0
    %417 = vmatpush1.msra.mxu0 0.0
    %418 = vmatprep.subr.mxu0 0.0
    %419 = vmatpush1.msra.mxu0 0.0
    %420 = vmatprep.subr.mxu0 0.0
    %421 = vmatpush1.msra.mxu0 0.0
    %422 = vmatprep.subr.mxu0 0.0
    %423 = vmatpush1.msra.mxu0 0.0
    %424 = vmatprep.subr.mxu0 0.0
    %425 = vmatpush1.msra.mxu0 0.0
    %426 = vmatprep.subr.mxu0 0.0
    %427 = vmatpush1.msra.mxu0 0.0
    %428 = vmatprep.subr.mxu0 0.0
    %429 = vmatpush1.msra.mxu0 0.0
    %430 = vmatprep.subr.mxu0 0.0
    %431 = vmatpush1.msra.mxu0 0.0
    %432 = vmatprep.subr.mxu0 0.0
    %433 = vmatpush1.msra.mxu0 0.0
    %434 = vmatprep.subr.mxu0 0.0
    %435 = vmatpush1.msra.mxu0 0.0
    %436 = vmatprep.subr.mxu0 0.0
    %437 = vmatpush1.msra.mxu0 0.0
    %438 = vmatprep.subr.mxu0 0.0
    %439 = vmatpush1.msra.mxu0 0.0
    %440 = vmatprep.subr.mxu0 0.0
    %441 = vmatpush1.msra.mxu0 0.0
    %442 = vmatprep.subr.mxu0 0.0
    %443 = vmatpush1.msra.mxu0 0.0
    %444 = vmatprep.subr.mxu0 0.0
    %445 = vmatpush1.msra.mxu0 0.0
    %446 = vmatprep.subr.mxu0 0.0
    %447 = vmatpush1.msra.mxu0 0.0
    %448 = vmatprep.subr.mxu0 0.0
    %449 = vmatpush1.msra.mxu0 0.0
    %450 = vmatprep.subr.mxu0 0.0
    %451 = vmatpush1.msra.mxu0 0.0
    %452 = vmatprep.subr.mxu0 0.0
    %453 = vmatpush1.msra.mxu0 0.0
    %454 = vmatprep.subr.mxu0 0.0
    %455 = vmatpush1.msra.mxu0 0.0
    %456 = vmatprep.subr.mxu0 0.0
    %457 = vmatpush1.msra.mxu0 0.0
    %458 = vmatprep.subr.mxu0 0.0
    %459 = vmatpush1.msra.mxu0 0.0
    %460 = vmatprep.subr.mxu0 0.0
    %461 = vmatpush1.msra.mxu0 0.0
    %462 = vmatprep.subr.mxu0 0.0
    %463 = vmatpush1.msra.mxu0 0.0
    %464 = vmatprep.subr.mxu0 0.0
    %465 = vmatpush1.msra.mxu0 0.0
    %466 = vmatprep.mubr.f32.mxu0 0.0
    %467 = vmatmul.mubr.f32.gmra.mrb[0].mxu0 %v396
    %v468 = vpop.f32.mrb[0].mxu0
    %v469 = vadd.f32 %v393, %v468
    %v470 = vpop.f32.mrb[0].mxu0
    %471 = vdwg.mxu0
    %v472 = vadd.f32 %v469, %v288
    %v474 = vrot.slane %v288, 2
    %475 = vrot.lane.b32.xlu0 %v474, 96
    %v476 = vpop.permute.xlu0 %475
    %v478 = vadd.f32 %v472, %v476
    %v479 = vrot.slane %v288, 4
    %480 = vrot.lane.b32.xlu0 %v479, 64
    %v481 = vpop.permute.xlu0 %480
    %v483 = vadd.f32 %v478, %v481
    %v484 = vrot.slane %v288, 6
    %485 = vrot.lane.b32.xlu0 %v484, 32
    %v486 = vpop.permute.xlu0 %485
    %v488 = vadd.f32 %v483, %v486
    %v489 = vadd.f32 %v488, %v294
    %v491 = vrot.slane %v294, 2
    %492 = vrot.lane.b32.xlu0 %v491, 96
    %v493 = vpop.permute.xlu0 %492
    %v495 = vadd.f32 %v489, %v493
    %v496 = vrot.slane %v294, 4
    %497 = vrot.lane.b32.xlu0 %v496, 64
    %v498 = vpop.permute.xlu0 %497
    %v500 = vadd.f32 %v495, %v498
    %v501 = vrot.slane %v294, 6
    %502 = vrot.lane.b32.xlu0 %v501, 32
    %v503 = vpop.permute.xlu0 %502
    %v505 = vadd.f32 %v500, %v503
    %v506 = vadd.f32 %v505, %v379
    %v508 = vrot.slane %v379, 2
    %509 = vrot.lane.b32.xlu0 %v508, 96
    %v510 = vpop.permute.xlu0 %509
    %v512 = vadd.f32 %v506, %v510
    %v513 = vrot.slane %v379, 4
    %514 = vrot.lane.b32.xlu0 %v513, 64
    %v515 = vpop.permute.xlu0 %514
    %v517 = vadd.f32 %v512, %v515
    %v518 = vrot.slane %v379, 6
    %519 = vrot.lane.b32.xlu0 %v518, 32
    %v520 = vpop.permute.xlu0 %519
    %v522 = vadd.f32 %v517, %v520
    %v523 = vadd.f32 %v522, %v385
    %v525 = vrot.slane %v385, 2
    %526 = vrot.lane.b32.xlu0 %v525, 96
    %v527 = vpop.permute.xlu0 %526
    %v529 = vadd.f32 %v523, %v527
    %v530 = vrot.slane %v385, 4
    %531 = vrot.lane.b32.xlu0 %v530, 64
    %v532 = vpop.permute.xlu0 %531
    %v534 = vadd.f32 %v529, %v532
    %v535 = vrot.slane %v385, 6
    %536 = vrot.lane.b32.xlu0 %v535, 32
    %v537 = vpop.permute.xlu0 %536
    %v539 = vadd.f32 %v534, %v537
    %v540 = vmax.f32 %v539, 0.0
    %vm541 = vcmask 254976
    %542 = vst.msk [vmem:[#allocation2] sm:$0x3] %vm541, %v540
    // Predicated region
    $region26: #{observation_shared_forward.1} parent=1 // pred_check
      _
    $region27: #{observation_shared_forward.1} parent=1 // pred_check_branch
      %544 = sbr.rel (0) target = $region29
    $region28: #{observation_shared_forward.1} parent=1 // pred_region
      %s546 = ssub.s32 32, 32
      %547 = vsyncadd [#allocation3], %s546
      %s549 = sshll.u32 [#allocation2], 4
      %s550 = int_to_ptr.vmem [resolvable:$true] %s549
      %552 = dma.vmem_to_hbm [thread:$0]  %s550, 32, %s6, [#allocation3]
    $region29: #{observation_shared_forward.1} parent=1 // pred_fallthru
      _
    // Predicated region
    $region30: #{observation_shared_forward.1} parent=1 // pred_check
      _
    $region31: #{observation_shared_forward.1} parent=1 // pred_check_branch
      %554 = sbr.rel (0) target = $region33
    $region32: #{observation_shared_forward.1} parent=1 // pred_region
      %555 = dma.done [#allocation3], 32
    $region33: #{observation_shared_forward.1} parent=1 // pred_fallthru
      _
    %556 = vsyncpa [#allocation3], 1

</llo_original>
